<compile_context>
chip_gen: v5e
topology: v5e:2x2
jax: 0.10.0
libtpu: 0.0.40
codegen_flags: <defaults>
</compile_context>

<pallas_src>
from functools import partial

import jax
import jax.numpy as jnp
from jax import lax
from jax.experimental import pallas as pl
from jax.experimental.pallas import tpu as pltpu

BN_EPS = 1e-5
LANE = 128
NEG_BIG = -1e30  # padded-logit bias; exp(NEG_BIG - m) underflows to exactly 0


def policy_kernel(x_ref, wscale_ref, bias_ref, wfc_ref, bfc_ref, out_ref):
    # x_ref:      (TB, C*HW)  VMEM  input dtype (f32 or bf16)
    # wscale_ref: (C,)        SMEM  conv weight with BN scale folded in (f32)
    # bias_ref:   (1,)        SMEM  conv bias + BN shift folded in (f32)
    # wfc_ref:    (HW, OP)    VMEM  fc weight (transposed), lane-padded to OP
    # bfc_ref:    (1, OP)     VMEM  fc bias, padded lanes set to NEG_BIG (f32)
    # out_ref:    (TB, OP)    VMEM  f32
    CHW = x_ref.shape[1]
    HW = wfc_ref.shape[0]
    C = CHW // HW

    # 1x1 conv (+ folded BatchNorm) on the VPU: K=C is tiny, keep it off the
    # MXU.  Channel slices are lane-contiguous (static, 128-aligned for
    # HW=256); upcast right after load so bf16 inputs work on v5e too.
    acc = x_ref[:, pl.ds(0, HW)].astype(jnp.float32) * wscale_ref[0]
    for c in range(1, C):
        acc = acc + x_ref[:, pl.ds(c * HW, HW)].astype(jnp.float32) * wscale_ref[c]
    act = jnp.maximum(acc + bias_ref[0], 0.0)                           # (TB, HW)

    # Fully connected on the MXU: (TB, HW) @ (HW, OP), f32 accumulate.
    logits = jnp.dot(act, wfc_ref[...],
                     preferred_element_type=jnp.float32) + bfc_ref[...]  # (TB, OP)

    # exp(log_softmax(logits)) == softmax(logits); padded lanes -> exactly 0.
    m = jnp.max(logits, axis=-1, keepdims=True)
    e = jnp.exp(logits - m)
    denom = jnp.sum(e, axis=-1, keepdims=True)
    probas = e * pl.reciprocal(denom, approx=False)
    out_ref[...] = probas.astype(out_ref.dtype)


def fold_policy_params(wconv, bconv, bn_params, wfc_t, bfc):
    """Fold conv bias + BN (inference running stats) into one affine and
    lane-pad the fc weight/bias.  Call ONCE; reuse across forward calls."""
    gamma, beta, mean, var = (bn_params[0], bn_params[1],
                              bn_params[2], bn_params[3])
    scale = gamma * lax.rsqrt(var + BN_EPS)
    wscale = (wconv[0] * scale).astype(jnp.float32)                          # (C,)
    bias_f = (((bconv[0] - mean) * scale) + beta).reshape(1).astype(jnp.float32)

    HW, O = wfc_t.shape
    OP = pl.cdiv(O, LANE) * LANE                 # lane-dense (128-padded) width
    wfc_pad = jnp.zeros((HW, OP), wfc_t.dtype).at[:, :O].set(wfc_t)
    bfc_pad = jnp.full((1, OP), NEG_BIG, jnp.float32).at[0, :O].set(
        bfc[0].astype(jnp.float32))
    return (wscale, bias_f, wfc_pad, bfc_pad)


def _pick_batch_tile(B, x_row_bytes, out_row_bytes):
    """Return (Bp, TB): padded batch (multiple of 8 only) and batch tile."""
    if B <= 8:
        return B, B                               # single full block, no pad
    Bp = ((B + 7) // 8) * 8
    # >= 2 grid steps so the "parallel" batch axis can use both v7x TCs.
    half = ((pl.cdiv(Bp, 2) + 7) // 8) * 8
    # Keep double-buffered x + out blocks well under v5e's 16 MiB scoped VMEM.
    budget = 10 * 1024 * 1024
    cap = max(8, (budget // (2 * (x_row_bytes + out_row_bytes))) // 8 * 8)
    return Bp, max(8, min(1024, half, cap))


@partial(jax.jit, static_argnames=("out_dim",))
def policy_forward(x_nchw, params, out_dim):
    wscale, bias_f, wfc_pad, bfc_pad = params
    B, C, H, W = x_nchw.shape
    HW = H * W
    CHW = C * HW
    OP = wfc_pad.shape[1]

    # Flatten to (B, C*HW) -- free, contiguous reshape; keep caller dtype.
    x = x_nchw.reshape(B, CHW)
    Bp, TB = _pick_batch_tile(B, CHW * x.dtype.itemsize, OP * 4)
    if Bp != B:
        x = jnp.pad(x, ((0, Bp - B), (0, 0)))     # zero-pad: padded rows finite

    out = pl.pallas_call(
        policy_kernel,
        out_shape=jax.ShapeDtypeStruct((Bp, OP), jnp.float32),
        grid_spec=pltpu.PrefetchScalarGridSpec(
            num_scalar_prefetch=0,
            grid=(pl.cdiv(Bp, TB),),
            in_specs=[
                pl.BlockSpec((TB, CHW), lambda b: (b, 0)),            # x (flattened)
                pl.BlockSpec(memory_space=pltpu.MemorySpace.SMEM),    # folded conv w
                pl.BlockSpec(memory_space=pltpu.MemorySpace.SMEM),    # folded bias
                pl.BlockSpec((HW, OP), lambda b: (0, 0)),             # fc weight^T
                pl.BlockSpec((1, OP), lambda b: (0, 0)),              # fc bias
            ],
            out_specs=pl.BlockSpec((TB, OP), lambda b: (b, 0)),
        ),
        compiler_params=pltpu.CompilerParams(
            dimension_semantics=("parallel",),    # batch rows are independent
        ),
    )(x, wscale, bias_f, wfc_pad, bfc_pad)
    return out[:B, :out_dim]


def reference_forward(x_nchw, wconv, bconv, bn_params, wfc_t, bfc):
    B, C, H, W = x_nchw.shape
    x = x_nchw.reshape(B, C, H * W).astype(jnp.float32)
    conv = jnp.einsum("oc,bcn->bn", wconv, x,
                      precision=lax.Precision.HIGHEST) + bconv[0]     # (B, HW)
    gamma, beta, mean, var = bn_params
    bn = (conv - mean) * (gamma / jnp.sqrt(var + BN_EPS)) + beta
    act = jnp.maximum(bn, 0.0)
    logits = jnp.dot(act, wfc_t, precision=lax.Precision.HIGHEST) + bfc[0]
    return jax.nn.softmax(logits, axis=-1)


if __name__ == "__main__":
    # Small shapes consistent with the module: grid_len=16 -> HW=256
    B, C, H, W = 2, 4, 16, 16
    O = 8
    HW = H * W

    key = jax.random.PRNGKey(0)
    k1, k2, k3, k4, k5 = jax.random.split(key, 5)

    x = jax.random.normal(k1, (B, C, H, W), dtype=jnp.float32)

    # Conv2d(inplanes, 1, kernel_size=1): weight (1, C, 1, 1) -> (1, C); bias (1,)
    wconv = jax.random.normal(k2, (1, C), dtype=jnp.float32) * 0.1
    bconv = jax.random.normal(k3, (1,), dtype=jnp.float32) * 0.1

    # BatchNorm2d(1): [gamma, beta, running_mean, running_var]
    bn_params = jnp.array([1.1, 0.05, 0.02, 0.9], dtype=jnp.float32)

    # Linear(HW, O): PyTorch weight is (O, HW); store transposed (HW, O); bias (1, O)
    wfc_t = jax.random.normal(k4, (HW, O), dtype=jnp.float32) * 0.05
    bfc = jax.random.normal(k5, (1, O), dtype=jnp.float32) * 0.05

    # Fold/pad weights ONCE (hoisted off the per-call path).
    params = fold_policy_params(wconv, bconv, bn_params, wfc_t, bfc)

    out = policy_forward(x, params, out_dim=O)
    out = jax.block_until_ready(out)

    ref = reference_forward(x, wconv, bconv, bn_params, wfc_t, bfc)
    assert out.shape == (B, O)
    assert jnp.allclose(out, ref, rtol=1e-5, atol=1e-5)
    assert jnp.allclose(jnp.sum(out, axis=-1), 1.0, atol=1e-5)

    print("KERNEL_OK")
</pallas_src>

<mosaic_0001>
module attributes {stable_mosaic.version = 11 : i64} {
  func.func @policy_kernel(%arg0: i32, %arg1: memref<2x1024xf32, #tpu.memory_space<vmem>>, %arg2: memref<4xf32, #tpu.memory_space<smem>>, %arg3: memref<1xf32, #tpu.memory_space<smem>>, %arg4: memref<256x128xf32, #tpu.memory_space<vmem>>, %arg5: memref<1x128xf32, #tpu.memory_space<vmem>>, %arg6: memref<2x128xf32, #tpu.memory_space<vmem>>) attributes {dimension_semantics = [#tpu.dimension_semantics<parallel>], iteration_bounds = array<i64: 1>, scalar_prefetch = 0 : i64, scratch_operands = 0 : i64, tpu.core_type = #tpu.core_type<tc>, window_params = [{transform_indices = @transform_0, window_bounds = array<i64: 2, 1024>}, {transform_indices = @transform_1, window_bounds = array<i64: 4>}, {transform_indices = @transform_2, window_bounds = array<i64: 1>}, {pipeline_mode = #tpu.pipeline_mode<synchronous>, transform_indices = @transform_3, window_bounds = array<i64: 256, 128>}, {pipeline_mode = #tpu.pipeline_mode<synchronous>, transform_indices = @transform_4, window_bounds = array<i64: 1, 128>}, {transform_indices = @transform_5, window_bounds = array<i64: 2, 128>}]} {
    %c0 = arith.constant 0 : index
    %c0_0 = arith.constant 0 : index
    %0 = vector.load %arg1[%c0, %c0_0] : memref<2x1024xf32, #tpu.memory_space<vmem>>, vector<2x256xf32>
    %c0_1 = arith.constant 0 : index
    %1 = memref.load %arg2[%c0_1] : memref<4xf32, #tpu.memory_space<smem>>
    %2 = vector.broadcast %1 : f32 to vector<2x256xf32>
    %3 = arith.mulf %0, %2 : vector<2x256xf32>
    %c0_2 = arith.constant 0 : index
    %c256 = arith.constant 256 : index
    %4 = vector.load %arg1[%c0_2, %c256] : memref<2x1024xf32, #tpu.memory_space<vmem>>, vector<2x256xf32>
    %c1 = arith.constant 1 : index
    %5 = memref.load %arg2[%c1] : memref<4xf32, #tpu.memory_space<smem>>
    %6 = vector.broadcast %5 : f32 to vector<2x256xf32>
    %7 = arith.mulf %4, %6 : vector<2x256xf32>
    %8 = arith.addf %3, %7 : vector<2x256xf32>
    %c0_3 = arith.constant 0 : index
    %c512 = arith.constant 512 : index
    %9 = vector.load %arg1[%c0_3, %c512] : memref<2x1024xf32, #tpu.memory_space<vmem>>, vector<2x256xf32>
    %c2 = arith.constant 2 : index
    %10 = memref.load %arg2[%c2] : memref<4xf32, #tpu.memory_space<smem>>
    %11 = vector.broadcast %10 : f32 to vector<2x256xf32>
    %12 = arith.mulf %9, %11 : vector<2x256xf32>
    %13 = arith.addf %8, %12 : vector<2x256xf32>
    %c0_4 = arith.constant 0 : index
    %c768 = arith.constant 768 : index
    %14 = vector.load %arg1[%c0_4, %c768] : memref<2x1024xf32, #tpu.memory_space<vmem>>, vector<2x256xf32>
    %c3 = arith.constant 3 : index
    %15 = memref.load %arg2[%c3] : memref<4xf32, #tpu.memory_space<smem>>
    %16 = vector.broadcast %15 : f32 to vector<2x256xf32>
    %17 = arith.mulf %14, %16 : vector<2x256xf32>
    %18 = arith.addf %13, %17 : vector<2x256xf32>
    %c0_5 = arith.constant 0 : index
    %19 = memref.load %arg3[%c0_5] : memref<1xf32, #tpu.memory_space<smem>>
    %20 = vector.broadcast %19 : f32 to vector<2x256xf32>
    %21 = arith.addf %18, %20 : vector<2x256xf32>
    %cst = arith.constant 0.000000e+00 : f32
    %22 = vector.broadcast %cst : f32 to vector<2x256xf32>
    %23 = arith.maximumf %21, %22 : vector<2x256xf32>
    %c0_6 = arith.constant 0 : index
    %c0_7 = arith.constant 0 : index
    %24 = vector.load %arg4[%c0_6, %c0_7] : memref<256x128xf32, #tpu.memory_space<vmem>>, vector<256x128xf32>
    %cst_8 = arith.constant dense<0.000000e+00> : vector<2x128xf32>
    %25 = tpu.matmul %23, %24, %cst_8 {dimension_numbers = #tpu.dot_dimension_numbers<[1], [0], [0], [1], [0, 0, 1, 1], [], []>} : vector<2x256xf32>, vector<256x128xf32>, vector<2x128xf32> -> vector<2x128xf32>
    %c0_9 = arith.constant 0 : index
    %c0_10 = arith.constant 0 : index
    %26 = vector.load %arg5[%c0_9, %c0_10] : memref<1x128xf32, #tpu.memory_space<vmem>>, vector<1x128xf32>
    %27 = vector.broadcast %26 : vector<1x128xf32> to vector<2x128xf32>
    %28 = arith.addf %25, %27 : vector<2x128xf32>
    %cst_11 = arith.constant dense<0xFF800000> : vector<2xf32>
    %29 = vector.multi_reduction <maximumf>, %28, %cst_11 [1] : vector<2x128xf32> to vector<2xf32>
    %30 = vector.shape_cast %29 : vector<2xf32> to vector<2x1xf32>
    %31 = vector.broadcast %30 : vector<2x1xf32> to vector<2x128xf32>
    %32 = arith.subf %28, %31 : vector<2x128xf32>
    %33 = math.exp %32 : vector<2x128xf32>
    %cst_12 = arith.constant dense<0.000000e+00> : vector<2xf32>
    %34 = vector.multi_reduction <add>, %33, %cst_12 [1] : vector<2x128xf32> to vector<2xf32>
    %35 = vector.shape_cast %34 : vector<2xf32> to vector<2x1xf32>
    %36 = tpu.reciprocal %35 : vector<2x1xf32> -> vector<2x1xf32>
    %37 = vector.broadcast %36 : vector<2x1xf32> to vector<2x128xf32>
    %38 = arith.mulf %33, %37 : vector<2x128xf32>
    %c0_13 = arith.constant 0 : index
    %c0_14 = arith.constant 0 : index
    %39 = vector.load %arg6[%c0_13, %c0_14] : memref<2x128xf32, #tpu.memory_space<vmem>>, vector<2x128xf32>
    tpu.vector_store %arg6[%c0_13, %c0_14], %38 {strides = array<i32>} : memref<2x128xf32, #tpu.memory_space<vmem>>, vector<2x128xf32>,
    return
  }
  func.func @transform_0(%arg0: i32) -> (i32, i32) {
    %c0_i32 = arith.constant 0 : i32
    %c0_i32_0 = arith.constant 0 : i32
    return %arg0, %c0_i32 : i32, i32
  }
  func.func @transform_1(%arg0: i32) -> i32 {
    %c0_i32 = arith.constant 0 : i32
    %c0_i32_0 = arith.constant 0 : i32
    return %c0_i32 : i32
  }
  func.func @transform_2(%arg0: i32) -> i32 {
    %c0_i32 = arith.constant 0 : i32
    %c0_i32_0 = arith.constant 0 : i32
    return %c0_i32 : i32
  }
  func.func @transform_3(%arg0: i32) -> (i32, i32) {
    %c0_i32 = arith.constant 0 : i32
    %c0_i32_0 = arith.constant 0 : i32
    %c0_i32_1 = arith.constant 0 : i32
    return %c0_i32, %c0_i32_0 : i32, i32
  }
  func.func @transform_4(%arg0: i32) -> (i32, i32) {
    %c0_i32 = arith.constant 0 : i32
    %c0_i32_0 = arith.constant 0 : i32
    %c0_i32_1 = arith.constant 0 : i32
    return %c0_i32, %c0_i32_0 : i32, i32
  }
  func.func @transform_5(%arg0: i32) -> (i32, i32) {
    %c0_i32 = arith.constant 0 : i32
    %c0_i32_0 = arith.constant 0 : i32
    return %arg0, %c0_i32 : i32, i32
  }
}

</mosaic_0001>

<llo_original>
// kernel: policy_forward.1
$region0: #{policy_forward.1}
  #allocation0 [shape = 'u32[]', space=smem, size = 0x4, offset = 0x4, fixed_abs, tag = 'smem constant byte address 0x4 - core index']
  #allocation1 [shape = 'u32[72,128]{1,0:T(1,128)}', space=vmem, size = 0x9000, scoped, tag = 'internal scratch']
  #allocation2 [shape = 'f32[1]{0:T(128)S(6)}', space=smem, size = 0x200, scoped, tag = 'scoped memory for policy_forward.1']
  %s0 = inlined_call_operand.vmem [shape: f32[2,1024], index: 0, kind: input, shape index: {}]
  %s1 = inlined_call_operand.vmem [shape: f32[4], index: 1, kind: input, shape index: {}]
  %s2 = inlined_call_operand.<no memory space> [shape: f32[1], index: 2, kind: input, shape index: {}]
  %s3 = inlined_call_operand.hbm [shape: f32[256,128], index: 3, kind: input, shape index: {}]
  %s4 = inlined_call_operand.vmem [shape: f32[1,128], index: 4, kind: input, shape index: {}]
  %s5 = inlined_call_operand.hbm [shape: f32[2,128], index: 5, kind: output, shape index: {}]
  %s6 = sld [smem:[#allocation0]]
  $region38: #{policy_forward.1} parent=0
    _
  %s8 = ssub.s32 1, %s6
  %s9 = scalar_select 0, %s8, %s6
  %10 = sst [smem:[#allocation2]] %s2
  $region1: #{policy_forward.1} parent=0
    #allocation3 [shape = 'u8[512]{0}', space=smem, size = 0x200, scoped, tag = 'input window, operand 1, single buffered']
    #allocation4 [shape = 's32[1]{0}', space=sflag, size = 0x4, scoped, tag = 'scoped memory for policy_forward.1']
    #allocation5 [shape = 's32[1]{0}', space=sflag, size = 0x4, scoped, tag = 'scoped memory for policy_forward.1']
    #allocation6 [shape = 's32[1]{0}', space=sflag, size = 0x4, scoped, tag = 'scoped memory for policy_forward.1']
    #allocation7 [shape = 'u8[131072]{0}', space=vmem, size = 0x20000, scoped, tag = 'input window, operand 3, single buffered']
    #allocation8 [shape = 'u8[1024]{0}', space=vmem, size = 0x400, scoped, tag = 'output window, operand 0, single buffered']
    %11 = vsyncpa [#allocation6], 0
    %12 = vsyncpa [#allocation4], 0
    %13 = vsyncpa [#allocation5], 0
    // Predicated region
    $region2: #{policy_forward.1} parent=1 // pred_check
      _
    $region3: #{policy_forward.1} parent=1 // pred_check_branch
      %15 = sbr.rel (0) target = $region5
    $region4: #{policy_forward.1} parent=1 // pred_region
      _
    $region5: #{policy_forward.1} parent=1 // pred_fallthru
      _
    // Predicated region
    $region6: #{policy_forward.1} parent=1 // pred_check
      _
    $region7: #{policy_forward.1} parent=1 // pred_check_branch
      %17 = sbr.rel (0) target = $region9
    $region8: #{policy_forward.1} parent=1 // pred_region
      %19 = vsyncadd [#allocation6], 0
      %s21 = sshll.u32 %s1, 4
      %s22 = int_to_ptr.vmem [resolvable:$true] %s21
      %24 = dma.vmem_to_smem %s22, 16, [#allocation3], [#allocation6]
    $region9: #{policy_forward.1} parent=1 // pred_fallthru
      _
    // Predicated region
    $region10: #{policy_forward.1} parent=1 // pred_check
      _
    $region11: #{policy_forward.1} parent=1 // pred_check_branch
      %26 = sbr.rel (0) target = $region13
    $region12: #{policy_forward.1} parent=1 // pred_region
      _
    $region13: #{policy_forward.1} parent=1 // pred_fallthru
      _
    // Predicated region
    $region14: #{policy_forward.1} parent=1 // pred_check
      _
    $region15: #{policy_forward.1} parent=1 // pred_check_branch
      %28 = sbr.rel (0) target = $region17
    $region16: #{policy_forward.1} parent=1 // pred_region
      %30 = vsyncadd [#allocation4], 0
      %s31 = sshll.u32 %s3, 4
      %s32 = int_to_ptr.hbm [resolvable:$true] %s31
      %s33 = sshll.u32 [#allocation7], 4
      %s34 = int_to_ptr.vmem [resolvable:$true] %s33
      %39 = dma.hbm_to_vmem [thread:$0]  %s32, 4096, %s34, [#allocation4], 128, 128, 8
    $region17: #{policy_forward.1} parent=1 // pred_fallthru
      _
    // Predicated region
    $region18: #{policy_forward.1} parent=1 // pred_check
      _
    $region19: #{policy_forward.1} parent=1 // pred_check_branch
      %41 = sbr.rel (0) target = $region21
    $region20: #{policy_forward.1} parent=1 // pred_region
      _
    $region21: #{policy_forward.1} parent=1 // pred_fallthru
      _
    // Predicated region
    $region22: #{policy_forward.1} parent=1 // pred_check
      _
    $region23: #{policy_forward.1} parent=1 // pred_check_branch
      %43 = sbr.rel (0) target = $region25
    $region24: #{policy_forward.1} parent=1 // pred_region
      %45 = dma.done [#allocation6], 16
    $region25: #{policy_forward.1} parent=1 // pred_fallthru
      _
    // Predicated region
    $region26: #{policy_forward.1} parent=1 // pred_check
      _
    $region27: #{policy_forward.1} parent=1 // pred_check_branch
      %47 = sbr.rel (0) target = $region29
    $region28: #{policy_forward.1} parent=1 // pred_region
      %49 = dma.done [#allocation4], 4096
    $region29: #{policy_forward.1} parent=1 // pred_fallthru
      _
    %50 = sfence
    %v51 = vld [vmem:[%s0] sm:$0xf]
    %s52 = sld [smem:[#allocation3]]
    %v53 = vstv %s52
    %v54 = vmul.f32 %v51, %v53
    %v55 = vld [vmem:[%s0 + $0x4] sm:$0xf]
    %s56 = sld [smem:[#allocation3 + $0x1]]
    %v57 = vstv %s56
    %v58 = vmul.f32 %v55, %v57
    %v59 = vadd.f32 %v54, %v58
    %v60 = vld [vmem:[%s0 + $0x8] sm:$0xf]
    %s61 = sld [smem:[#allocation3 + $0x2]]
    %v62 = vstv %s61
    %v63 = vmul.f32 %v60, %v62
    %v64 = vadd.f32 %v59, %v63
    %v65 = vld [vmem:[%s0 + $0xc] sm:$0xf]
    %s66 = sld [smem:[#allocation3 + $0x3]]
    %v67 = vstv %s66
    %v68 = vmul.f32 %v65, %v67
    %v69 = vadd.f32 %v64, %v68
    %s70 = sld [smem:[#allocation2]]
    %v71 = vstv %s70
    %v72 = vadd.f32 %v69, %v71
    %v73 = vmax.f32 %v72, 0.0
    %v74 = vld [vmem:[#allocation7] sm:$0xff]
    %v75 = vld [vmem:[#allocation7 + $0x8] sm:$0xff]
    %v76 = vld [vmem:[#allocation7 + $0x10] sm:$0xff]
    %v77 = vld [vmem:[#allocation7 + $0x18] sm:$0xff]
    %v78 = vld [vmem:[#allocation7 + $0x20] sm:$0xff]
    %v79 = vld [vmem:[#allocation7 + $0x28] sm:$0xff]
    %v80 = vld [vmem:[#allocation7 + $0x30] sm:$0xff]
    %v81 = vld [vmem:[#allocation7 + $0x38] sm:$0xff]
    %v82 = vld [vmem:[#allocation7 + $0x40] sm:$0xff]
    %v83 = vld [vmem:[#allocation7 + $0x48] sm:$0xff]
    %v84 = vld [vmem:[#allocation7 + $0x50] sm:$0xff]
    %v85 = vld [vmem:[#allocation7 + $0x58] sm:$0xff]
    %v86 = vld [vmem:[#allocation7 + $0x60] sm:$0xff]
    %v87 = vld [vmem:[#allocation7 + $0x68] sm:$0xff]
    %v88 = vld [vmem:[#allocation7 + $0x70] sm:$0xff]
    %v89 = vld [vmem:[#allocation7 + $0x78] sm:$0xff]
    %v90 = vld [vmem:[#allocation7 + $0x80] sm:$0xff]
    %v91 = vld [vmem:[#allocation7 + $0x88] sm:$0xff]
    %v92 = vld [vmem:[#allocation7 + $0x90] sm:$0xff]
    %v93 = vld [vmem:[#allocation7 + $0x98] sm:$0xff]
    %v94 = vld [vmem:[#allocation7 + $0xa0] sm:$0xff]
    %v95 = vld [vmem:[#allocation7 + $0xa8] sm:$0xff]
    %v96 = vld [vmem:[#allocation7 + $0xb0] sm:$0xff]
    %v97 = vld [vmem:[#allocation7 + $0xb8] sm:$0xff]
    %v98 = vld [vmem:[#allocation7 + $0xc0] sm:$0xff]
    %v99 = vld [vmem:[#allocation7 + $0xc8] sm:$0xff]
    %v100 = vld [vmem:[#allocation7 + $0xd0] sm:$0xff]
    %v101 = vld [vmem:[#allocation7 + $0xd8] sm:$0xff]
    %v102 = vld [vmem:[#allocation7 + $0xe0] sm:$0xff]
    %v103 = vld [vmem:[#allocation7 + $0xe8] sm:$0xff]
    %v104 = vld [vmem:[#allocation7 + $0xf0] sm:$0xff]
    %v105 = vld [vmem:[#allocation7 + $0xf8] sm:$0xff]
    %v106 = vld [vmem:[%s4] sm:$0x1]
    %v108 = vperm.slane %v106, 0
    %111 = vst [vmem:[#allocation1] ss:$4 sm:$0xff] %v73
    %v112 = vld.sshfl [vmem:[#allocation1] sm:$0xff pattern:$0x73625140]
    %v113 = vld.sshfl [vmem:[#allocation1 + $0x8] sm:$0xff pattern:$0x73625140]
    %116 = vmatpush.msra.mxu0 %v89
    %117 = vmatpush.msra.mxu0 %v88
    %118 = vmatpush.msra.mxu0 %v87
    %119 = vmatpush.msra.mxu0 %v86
    %120 = vmatpush.msra.mxu0 %v85
    %121 = vmatpush.msra.mxu0 %v84
    %122 = vmatpush.msra.mxu0 %v83
    %123 = vmatpush.msra.mxu0 %v82
    %124 = vmatpush.msra.mxu0 %v81
    %125 = vmatpush.msra.mxu0 %v80
    %126 = vmatpush.msra.mxu0 %v79
    %127 = vmatpush.msra.mxu0 %v78
    %128 = vmatpush.msra.mxu0 %v77
    %129 = vmatpush.msra.mxu0 %v76
    %130 = vmatpush.msra.mxu0 %v75
    %131 = vmatpush.msra.mxu0 %v74
    %132 = vmatmul.f32.gmra.mxu0 %v112
    %v133 = vpop.f32.mrf.mxu0
    %v134 = vadd.f32 %v108, %v133
    %135 = vdwg.mxu0
    %136 = vmatpush.msra.mxu0 %v105
    %137 = vmatpush.msra.mxu0 %v104
    %138 = vmatpush.msra.mxu0 %v103
    %139 = vmatpush.msra.mxu0 %v102
    %140 = vmatpush.msra.mxu0 %v101
    %141 = vmatpush.msra.mxu0 %v100
    %142 = vmatpush.msra.mxu0 %v99
    %143 = vmatpush.msra.mxu0 %v98
    %144 = vmatpush.msra.mxu0 %v97
    %145 = vmatpush.msra.mxu0 %v96
    %146 = vmatpush.msra.mxu0 %v95
    %147 = vmatpush.msra.mxu0 %v94
    %148 = vmatpush.msra.mxu0 %v93
    %149 = vmatpush.msra.mxu0 %v92
    %150 = vmatpush.msra.mxu0 %v91
    %151 = vmatpush.msra.mxu0 %v90
    %152 = vmatmul.f32.gmra.mxu0 %v113
    %v153 = vpop.f32.mrf.mxu0
    %v154 = vadd.f32 %v134, %v153
    %155 = vdwg.mxu0
    %vm156 = vcmask 1041408
    %v157 = vsel %vm156, %v154, -inf
    %158 = vmax.xlane.f32.xlu0 %v157
    %v159 = vpop.xlane.xlu0 %158
    %v160 = vsub.f32 %v154, %v159
    %v161 = vmul.f32 %v160, 1.442695
    %v162 = vpow.pop %v161
    %v163 = vsel %vm156, %v162, 0.0
    %164 = vadd.xlane.f32.xlu0 %v163
    %v165 = vpop.xlane.xlu0 %164
    %v166 = vrcp.pop %v165
    %v167 = vmul.f32 %v165, %v166
    %v168 = vsub.f32 1.0, %v167
    %v169 = vmul.f32 %v166, %v168
    %v170 = vadd.f32 %v166, %v169
    %vm171 = vweird.f32 %v165
    %vm172 = vweird.f32 %v166
    %vm173 = vmor %vm171, %vm172
    %v174 = vsel %vm173, %v166, %v170
    %v175 = vand.u32 2147483647, %v165
    %vm176 = vcmp.eq.f32.partialorder %v175, 8.507059e+37
    %v177 = vand.u32 %v165, 2147483648
    %v178 = vor.u32 1.1754944e-38, %v177
    %v179 = vsel %vm176, %v178, %v174
    %v180 = vmul.f32 %v162, %v179
    %181 = vst [vmem:[#allocation8] sm:$0x3] %v180
    // Predicated region
    $region30: #{policy_forward.1} parent=1 // pred_check
      _
    $region31: #{policy_forward.1} parent=1 // pred_check_branch
      %183 = sbr.rel (0) target = $region33
    $region32: #{policy_forward.1} parent=1 // pred_region
      %185 = vsyncadd [#allocation5], 0
      %s187 = sshll.u32 [#allocation8], 4
      %s188 = int_to_ptr.vmem [resolvable:$true] %s187
      %s189 = sshll.u32 %s5, 4
      %s190 = int_to_ptr.hbm [resolvable:$true] %s189
      %192 = dma.vmem_to_hbm [thread:$0]  %s188, 32, %s190, [#allocation5]
    $region33: #{policy_forward.1} parent=1 // pred_fallthru
      _
    // Predicated region
    $region34: #{policy_forward.1} parent=1 // pred_check
      _
    $region35: #{policy_forward.1} parent=1 // pred_check_branch
      %194 = sbr.rel (0) target = $region37
    $region36: #{policy_forward.1} parent=1 // pred_region
      %196 = dma.done [#allocation5], 32
    $region37: #{policy_forward.1} parent=1 // pred_fallthru
      _
    %197 = vsyncpa [#allocation4], 1
    %198 = vsyncpa [#allocation5], 1
    %199 = vsyncpa [#allocation6], 1

</llo_original>
